<compile_context>
chip_gen: v5e
topology: v5e:2x2
jax: 0.10.0
libtpu: 0.0.40
codegen_flags: <defaults>
</compile_context>

<pallas_src>
import functools
import math

import jax
import jax.numpy as jnp
from jax.experimental import pallas as pl
from jax.experimental.pallas import tpu as pltpu


def _label_smoothing_kernel(logits_ref, target_ref, partial_ref, *,
                            confidence, smoothing_value, ignore_index,
                            const_xlogy, batch):
    """One batch tile -> un-normalized loss contribution of that tile."""
    x = logits_ref[...].astype(jnp.float32)           # (TB, V)
    tgt = target_ref[...]                              # (TB, 1) int32
    TB, V = x.shape

    # ---- log-sum-exp pieces (max-shifted); reductions are per-row (lane axis) ----
    m = jnp.max(x, axis=-1, keepdims=True)             # (TB, 1)
    shifted = x - m                                     # (TB, V)
    lse = jnp.log(jnp.sum(jnp.exp(shifted), axis=-1, keepdims=True))   # (TB, 1)

    # ---- sum_j p_j * shifted_j without materializing p ----
    #   smoothing_value * rowsum(shifted)
    # + (confidence - smoothing_value) * shifted[i, tgt[i]]
    # - smoothing_value * shifted[i, ignore_index]
    row_sum = jnp.sum(shifted, axis=-1, keepdims=True)                  # (TB, 1)
    col = jax.lax.broadcasted_iota(jnp.int32, (TB, V), 1)
    tgt_val = jnp.sum(jnp.where(col == tgt, shifted, 0.0),
                      axis=-1, keepdims=True)                           # (TB, 1)
    ign_val = shifted[:, ignore_index:ignore_index + 1]                 # (TB, 1) static lane slice
    p_dot_shift = (jnp.float32(smoothing_value) * row_sum
                   + jnp.float32(confidence - smoothing_value) * tgt_val
                   - jnp.float32(smoothing_value) * ign_val)            # (TB, 1)

    # ---- per-row loss ----
    # For a valid row: sum_j xlogy(p,p) == const_xlogy and sum_j p_j == 1, so
    #   row_loss = const_xlogy - (p·shifted - lse) = const_xlogy - p·shifted + lse
    # Ignored rows and batch-padding rows of the last partial tile contribute 0.
    row_id = (pl.program_id(0) * TB
              + jax.lax.broadcasted_iota(jnp.int32, (TB, 1), 0))        # global row index
    valid = jnp.logical_and(row_id < batch, tgt != ignore_index)        # (TB, 1)
    row_loss = jnp.where(valid,
                         jnp.float32(const_xlogy) - p_dot_shift + lse,
                         0.0)

    tile_sum = jnp.sum(row_loss)
    # Lane-dense (1, 1, 128) store of the tile partial (lane 0 is read back).
    partial_ref[...] = jnp.broadcast_to(tile_sum, (1, 1, 128)).astype(jnp.float32)


def _choose_tile_rows(B, V, itemsize):
    """Biggest batch tile that keeps the double-buffered logits DMA in budget."""
    per_buf_budget = 12 * 1024 * 1024          # bytes per pipeline buffer
    max_rows = max(8, per_buf_budget // max(1, V * itemsize))
    tb = min(B, 512, max_rows)
    if tb < B:
        tb = max(8, (tb // 8) * 8)             # keep partial blocks (8, 128)-aligned
    return tb


def label_smoothing_loss(logits, target, *, label_smoothing, ignore_index, tb=None):
    """logits: (B, V) float (any dtype); target: (B,) int. Returns scalar f32 loss."""
    B, V = logits.shape
    assert 0 <= ignore_index < V, "ignore_index must be a valid class id"
    confidence = 1.0 - label_smoothing
    smoothing_value = label_smoothing / (V - 2)

    # sum_j xlogy(p_j, p_j) for a non-ignored row is a compile-time constant.
    const_xlogy = (V - 2) * smoothing_value * math.log(smoothing_value)
    if confidence > 0.0:
        const_xlogy += confidence * math.log(confidence)

    if tb is None:
        tb = _choose_tile_rows(B, V, jnp.dtype(logits.dtype).itemsize)
    num_blocks = pl.cdiv(B, tb)

    target_col = target.astype(jnp.int32).reshape(B, 1)

    kernel = functools.partial(
        _label_smoothing_kernel,
        confidence=confidence,
        smoothing_value=smoothing_value,
        ignore_index=ignore_index,
        const_xlogy=const_xlogy,
        batch=B,
    )

    grid_spec = pltpu.PrefetchScalarGridSpec(
        num_scalar_prefetch=0,
        grid=(num_blocks,),
        in_specs=[
            pl.BlockSpec((tb, V), lambda i: (i, 0)),   # logits tile (native dtype)
            pl.BlockSpec((tb, 1), lambda i: (i, 0)),   # target column (int32)
        ],
        # one lane-dense partial-sum block per grid step -> no accumulator carry
        out_specs=pl.BlockSpec((1, 1, 128), lambda i: (i, 0, 0)),
    )

    partials = pl.pallas_call(
        kernel,
        out_shape=jax.ShapeDtypeStruct((num_blocks, 1, 128), jnp.float32),
        grid_spec=grid_spec,
        compiler_params=pltpu.CompilerParams(
            dimension_semantics=("parallel",),      # independent blocks -> megacore on v7x
            vmem_limit_bytes=40 * 1024 * 1024),
    )(logits, target_col)

    # Tiny final reduction + batchmean normalization in plain JAX.
    return jnp.sum(partials[:, 0, 0]) / B


def _reference(logits, target, *, label_smoothing, ignore_index):
    """Pure-JAX reference mirroring the PyTorch module."""
    B, V = logits.shape
    confidence = 1.0 - label_smoothing
    smoothing_value = label_smoothing / (V - 2)
    log_probs = jax.nn.log_softmax(logits.astype(jnp.float32), axis=-1)
    col = jnp.arange(V)[None, :]
    tgt = target[:, None]
    p = jnp.where(col == tgt, confidence,
                  jnp.where(col == ignore_index, 0.0, smoothing_value))
    p = jnp.where(tgt == ignore_index, 0.0, p)
    xlogy = jnp.where(p > 0.0, p * jnp.log(jnp.where(p > 0.0, p, 1.0)), 0.0)
    return jnp.sum(xlogy - p * log_probs) / B


if __name__ == "__main__":
    B, V = 20, 256                      # batch_size x n_classes (small demo shapes)
    label_smoothing = 0.1
    ignore_index = 0                    # PAD-style ignore index (valid class id)

    key = jax.random.PRNGKey(0)
    k_logits, k_tgt = jax.random.split(key)
    logits = jax.random.normal(k_logits, (B, V), dtype=jnp.float32)
    target = jax.random.randint(k_tgt, (B,), 0, V, dtype=jnp.int32)
    # force at least one ignored row to exercise the masking path
    target = target.at[1].set(ignore_index)

    # tb=8 forces multiple grid steps plus a padded final tile (20 = 2*8 + 4),
    # exercising the batch tiling, "parallel" partials, and the row mask.
    loss = label_smoothing_loss(
        logits, target, label_smoothing=label_smoothing,
        ignore_index=ignore_index, tb=8)
    loss = jax.block_until_ready(loss)

    ref = _reference(logits, target, label_smoothing=label_smoothing,
                     ignore_index=ignore_index)
    assert jnp.allclose(loss, ref, rtol=1e-5, atol=1e-6), (loss, ref)

    print("KERNEL_OK")
</pallas_src>

<mosaic_0001>
module attributes {stable_mosaic.version = 11 : i64} {
  func.func @_label_smoothing_kernel(%arg0: i32, %arg1: memref<8x256xf32, #tpu.memory_space<vmem>>, %arg2: memref<8x1xi32, #tpu.memory_space<vmem>>, %arg3: memref<1x1x128xf32, #tpu.memory_space<vmem>>) attributes {dimension_semantics = [#tpu.dimension_semantics<parallel>], iteration_bounds = array<i64: 3>, scalar_prefetch = 0 : i64, scratch_operands = 0 : i64, tpu.core_type = #tpu.core_type<tc>, window_params = [{transform_indices = @transform_0, window_bounds = array<i64: 8, 256>}, {transform_indices = @transform_1, window_bounds = array<i64: 8, 1>}, {transform_indices = @transform_2, window_bounds = array<i64: 1, 1, 128>}]} {
    %c0 = arith.constant 0 : index
    %c0_0 = arith.constant 0 : index
    %0 = vector.load %arg1[%c0, %c0_0] : memref<8x256xf32, #tpu.memory_space<vmem>>, vector<8x256xf32>
    %c0_1 = arith.constant 0 : index
    %c0_2 = arith.constant 0 : index
    %1 = vector.load %arg2[%c0_1, %c0_2] : memref<8x1xi32, #tpu.memory_space<vmem>>, vector<8x1xi32>
    %cst = arith.constant dense<0xFF800000> : vector<8xf32>
    %2 = vector.multi_reduction <maximumf>, %0, %cst [1] : vector<8x256xf32> to vector<8xf32>
    %3 = vector.shape_cast %2 : vector<8xf32> to vector<8x1xf32>
    %4 = vector.broadcast %3 : vector<8x1xf32> to vector<8x256xf32>
    %5 = arith.subf %0, %4 : vector<8x256xf32>
    %6 = math.exp %5 : vector<8x256xf32>
    %cst_3 = arith.constant dense<0.000000e+00> : vector<8xf32>
    %7 = vector.multi_reduction <add>, %6, %cst_3 [1] : vector<8x256xf32> to vector<8xf32>
    %8 = vector.shape_cast %7 : vector<8xf32> to vector<8x1xf32>
    %9 = math.log %8 : vector<8x1xf32>
    %cst_4 = arith.constant dense<0.000000e+00> : vector<8xf32>
    %10 = vector.multi_reduction <add>, %5, %cst_4 [1] : vector<8x256xf32> to vector<8xf32>
    %11 = vector.shape_cast %10 : vector<8xf32> to vector<8x1xf32>
    %12 = tpu.iota {dimensions = array<i32: 1>} : vector<8x256xi32>
    %13 = vector.broadcast %1 : vector<8x1xi32> to vector<8x256xi32>
    %14 = arith.cmpi eq, %12, %13 : vector<8x256xi32>
    %cst_5 = arith.constant 0.000000e+00 : f32
    %15 = vector.broadcast %cst_5 : f32 to vector<8x256xf32>
    %16 = arith.select %14, %5, %15 : vector<8x256xi1>, vector<8x256xf32>
    %cst_6 = arith.constant dense<0.000000e+00> : vector<8xf32>
    %17 = vector.multi_reduction <add>, %16, %cst_6 [1] : vector<8x256xf32> to vector<8xf32>
    %18 = vector.shape_cast %17 : vector<8xf32> to vector<8x1xf32>
    %19 = vector.extract_strided_slice %5 {offsets = [0, 0], sizes = [8, 1], strides = [1, 1]} : vector<8x256xf32> to vector<8x1xf32>
    %cst_7 = arith.constant 3.93700786E-4 : f32
    %20 = vector.broadcast %cst_7 : f32 to vector<8x1xf32>
    %21 = arith.mulf %20, %11 : vector<8x1xf32>
    %cst_8 = arith.constant 0.899606287 : f32
    %22 = vector.broadcast %cst_8 : f32 to vector<8x1xf32>
    %23 = arith.mulf %22, %18 : vector<8x1xf32>
    %24 = arith.addf %21, %23 : vector<8x1xf32>
    %cst_9 = arith.constant 3.93700786E-4 : f32
    %25 = vector.broadcast %cst_9 : f32 to vector<8x1xf32>
    %26 = arith.mulf %25, %19 : vector<8x1xf32>
    %27 = arith.subf %24, %26 : vector<8x1xf32>
    %c8_i32 = arith.constant 8 : i32
    %28 = arith.muli %arg0, %c8_i32 : i32
    %29 = tpu.iota {dimensions = array<i32: 0>} : vector<8x1xi32>
    %30 = vector.broadcast %28 : i32 to vector<8x1xi32>
    %31 = arith.addi %30, %29 : vector<8x1xi32>
    %c20_i32 = arith.constant 20 : i32
    %32 = vector.broadcast %c20_i32 : i32 to vector<8x1xi32>
    %33 = arith.cmpi slt, %31, %32 : vector<8x1xi32>
    %c0_i32 = arith.constant 0 : i32
    %34 = vector.broadcast %c0_i32 : i32 to vector<8x1xi32>
    %35 = arith.cmpi ne, %1, %34 : vector<8x1xi32>
    %36 = arith.andi %33, %35 : vector<8x1xi1>
    %cst_10 = arith.constant -0.878816425 : f32
    %37 = vector.broadcast %cst_10 : f32 to vector<8x1xf32>
    %38 = arith.subf %37, %27 : vector<8x1xf32>
    %39 = arith.addf %38, %9 : vector<8x1xf32>
    %cst_11 = arith.constant 0.000000e+00 : f32
    %40 = vector.broadcast %cst_11 : f32 to vector<8x1xf32>
    %41 = arith.select %36, %39, %40 : vector<8x1xi1>, vector<8x1xf32>
    %42 = vector.shape_cast %41 : vector<8x1xf32> to vector<1x8x1xf32>
    %cst_12 = arith.constant dense<0.000000e+00> : vector<1xf32>
    %43 = vector.multi_reduction <add>, %42, %cst_12 [1, 2] : vector<1x8x1xf32> to vector<1xf32>
    %44 = vector.shape_cast %43 : vector<1xf32> to vector<1x1x1xf32>
    %45 = vector.extract %44[0, 0, 0] : f32 from vector<1x1x1xf32>
    %46 = vector.broadcast %45 : f32 to vector<1x1x128xf32>
    %c0_13 = arith.constant 0 : index
    %c0_14 = arith.constant 0 : index
    %c0_15 = arith.constant 0 : index
    %47 = vector.load %arg3[%c0_13, %c0_14, %c0_15] : memref<1x1x128xf32, #tpu.memory_space<vmem>>, vector<1x1x128xf32>
    tpu.vector_store %arg3[%c0_13, %c0_14, %c0_15], %46 {strides = array<i32>} : memref<1x1x128xf32, #tpu.memory_space<vmem>>, vector<1x1x128xf32>,
    return
  }
  func.func @transform_0(%arg0: i32) -> (i32, i32) {
    %c0_i32 = arith.constant 0 : i32
    %c0_i32_0 = arith.constant 0 : i32
    return %arg0, %c0_i32 : i32, i32
  }
  func.func @transform_1(%arg0: i32) -> (i32, i32) {
    %c0_i32 = arith.constant 0 : i32
    %c0_i32_0 = arith.constant 0 : i32
    return %arg0, %c0_i32 : i32, i32
  }
  func.func @transform_2(%arg0: i32) -> (i32, i32, i32) {
    %c0_i32 = arith.constant 0 : i32
    %c0_i32_0 = arith.constant 0 : i32
    %c0_i32_1 = arith.constant 0 : i32
    return %arg0, %c0_i32, %c0_i32_0 : i32, i32, i32
  }
}

</mosaic_0001>

<llo_original>
// kernel: tpu_custom_call.1
$region0: #{tpu_custom_call.1}
  #allocation0 [shape = 'u32[]', space=smem, size = 0x4, offset = 0x4, fixed_abs, tag = 'smem constant byte address 0x4 - core index']
  #allocation1 [shape = 'u32[72,128]{1,0:T(1,128)}', space=vmem, size = 0x9000, scoped, tag = 'internal scratch']
  %s0 = inlined_call_operand.hbm [shape: f32[20,256], index: 0, kind: input, shape index: {}]
  %s1 = inlined_call_operand.vmem [shape: s32[20,1], index: 1, kind: input, shape index: {}]
  %s2 = inlined_call_operand.hbm [shape: f32[3,1,128], index: 2, kind: output, shape index: {}]
  %s3 = sld [smem:[#allocation0]]
  $region45: #{tpu_custom_call.1} parent=0
    _
  %s5 = ssub.s32 1, %s3
  %s6 = scalar_select 0, %s5, %s3
  $region1: #{tpu_custom_call.1} parent=0
    #allocation2 [shape = 'u8[16384]{0}', space=vmem, size = 0x4000, scoped, tag = 'input window, operand 0']
    #allocation3 [shape = 's32[2]{0}', space=sflag, size = 0x8, scoped, tag = 'scoped memory for tpu_custom_call.1']
    #allocation4 [shape = 's32[2]{0}', space=sflag, size = 0x8, scoped, tag = 'scoped memory for tpu_custom_call.1']
    #allocation5 [shape = 'u8[1024]{0}', space=vmem, size = 0x400, scoped, tag = 'output window, operand 0']
    %7 = vsyncpa [#allocation3], 0
    %s8 = scalar_lea.sflag [#allocation3], 1
    %9 = vsyncpa %s8, 0
    %10 = vsyncpa [#allocation4], 0
    %s11 = scalar_lea.sflag [#allocation4], 1
    %12 = vsyncpa %s11, 0
    loop: start=0, step=1, limit=5
    $region2: #{tpu_custom_call.1} parent=1 // loop_pre_header
      _
    $region3: #{tpu_custom_call.1} parent=1 // loop_header
      %s14 = sphi 0, %s18
      %p15 = scmp.ge.s32.totalorder %s14, 5
      %s24 = sphi 0, %s26
      %s27 = sphi 0, %s24
      %s28 = sphi 0, %s27
      %s44 = sphi 0, %s28
      %s50 = sphi 0, %s52
      %s53 = sphi 0, %s50
      %s54 = sphi 0, %s53
      %s70 = sphi 0, %s54
      %s76 = sphi 0, %s78
      %s79 = sphi 0, %s76
      %s80 = sphi 0, %s79
      %s96 = sphi 0, %s80
    $region4: #{tpu_custom_call.1} parent=1 // loop_header_branch
      %17 = sbr.rel (%p15) target = $region8
    $region5: #{tpu_custom_call.1} parent=1 // loop_body
      %s19 = ssub.s32 %s14, 1
      %s20 = ssub.s32 %s14, 2
      %s21 = sadd.s32 %s14, 1
      %s22 = ssub.s32 %s14, %s21
      %p23 = scmp.eq.s32.totalorder %s22, 0
      %s25 = sadd.s32 %s24, 1
      %s26 = scalar_select %p23, %s24, %s25
      %p29 = pneg %p23
      %p30 = scmp.eq.s32.totalorder %s14, 2
      %p31 = por %p29, %p30
      %p32 = scmp.ne.s32.totalorder %s24, %s27
      %p33 = scmp.eq.s32.totalorder %s14, 0
      %p34 = por %p32, %p33
      %p35 = scmp.ne.s32.totalorder %s24, %s27
      %p36 = scmp.eq.s32.totalorder %s19, 2
      %p37 = por %p35, %p36
      %p38 = scmp.ne.s32.totalorder %s27, %s28
      %p39 = scmp.eq.s32.totalorder %s19, 0
      %p40 = por %p38, %p39
      %p41 = scmp.ne.s32.totalorder %s27, %s28
      %p42 = scmp.eq.s32.totalorder %s20, 2
      %p43 = por %p41, %p42
      %p45 = scmp.ne.s32.totalorder %s28, %s44
      %p46 = scmp.eq.s32.totalorder %s20, 0
      %p47 = por %p45, %p46
      %s48 = ssub.s32 %s14, %s21
      %p49 = scmp.eq.s32.totalorder %s48, 0
      %s51 = sadd.s32 %s50, 1
      %s52 = scalar_select %p49, %s50, %s51
      %p55 = pneg %p49
      %p56 = scmp.eq.s32.totalorder %s14, 2
      %p57 = por %p55, %p56
      %p58 = scmp.ne.s32.totalorder %s50, %s53
      %p59 = scmp.eq.s32.totalorder %s14, 0
      %p60 = por %p58, %p59
      %p61 = scmp.ne.s32.totalorder %s50, %s53
      %p62 = scmp.eq.s32.totalorder %s19, 2
      %p63 = por %p61, %p62
      %p64 = scmp.ne.s32.totalorder %s53, %s54
      %p65 = scmp.eq.s32.totalorder %s19, 0
      %p66 = por %p64, %p65
      %p67 = scmp.ne.s32.totalorder %s53, %s54
      %p68 = scmp.eq.s32.totalorder %s20, 2
      %p69 = por %p67, %p68
      %p71 = scmp.ne.s32.totalorder %s54, %s70
      %p72 = scmp.eq.s32.totalorder %s20, 0
      %p73 = por %p71, %p72
      %s74 = ssub.s32 %s14, %s21
      %p75 = scmp.eq.s32.totalorder %s74, 0
      %s77 = sadd.s32 %s76, 1
      %s78 = scalar_select %p75, %s76, %s77
      %p81 = pneg %p75
      %p82 = scmp.eq.s32.totalorder %s14, 2
      %p83 = por %p81, %p82
      %p84 = scmp.ne.s32.totalorder %s76, %s79
      %p85 = scmp.eq.s32.totalorder %s14, 0
      %p86 = por %p84, %p85
      %p87 = scmp.ne.s32.totalorder %s76, %s79
      %p88 = scmp.eq.s32.totalorder %s19, 2
      %p89 = por %p87, %p88
      %p90 = scmp.ne.s32.totalorder %s79, %s80
      %p91 = scmp.eq.s32.totalorder %s19, 0
      %p92 = por %p90, %p91
      %p93 = scmp.ne.s32.totalorder %s79, %s80
      %p94 = scmp.eq.s32.totalorder %s20, 2
      %p95 = por %p93, %p94
      %p97 = scmp.ne.s32.totalorder %s80, %s96
      %p98 = scmp.eq.s32.totalorder %s20, 0
      %p99 = por %p97, %p98
      %p100 = scmp.le.s32.totalorder 1, %s14
      %p101 = scmp.lt.s32.totalorder %s14, 4
      %p102 = pnand %p100, %p101
      %p103 = pneg %p102
      // Predicated region
      $region9: #{tpu_custom_call.1} parent=5 // pred_check
        _
      $region10: #{tpu_custom_call.1} parent=5 // pred_check_branch
        %105 = sbr.rel (%p102) target = $region12
      $region11: #{tpu_custom_call.1} parent=5 // pred_region
        %s106 = ssub.s32 %s14, 1
      $region12: #{tpu_custom_call.1} parent=5 // pred_fallthru
        _
      %p107 = scmp.lt.s32.totalorder %s14, 3
      // Predicated region
      $region13: #{tpu_custom_call.1} parent=5 // pred_check
        %p108 = pneg %p107
      $region14: #{tpu_custom_call.1} parent=5 // pred_check_branch
        %110 = sbr.rel (%p108) target = $region16
      $region15: #{tpu_custom_call.1} parent=5 // pred_region
        // Predicated region
        $region17: #{tpu_custom_call.1} parent=15 // pred_check
          %p111 = pneg %p34
        $region18: #{tpu_custom_call.1} parent=15 // pred_check_branch
          %113 = sbr.rel (%p111) target = $region20
        $region19: #{tpu_custom_call.1} parent=15 // pred_region
          %s114 = sand.u32 %s24, 1
          %s115 = scalar_lea.sflag [#allocation3], %s114
          %s116 = sand.u32 %s24, 1
          %s117 = smul.addr %s116, 16
          %s118 = scalar_lea.vmem [#allocation2], %s117
          %120 = vsyncadd %s115, 0
          %s121 = smul.addr %s14, 2
          %s122 = smul.addr %s121, 8
          %s123 = scalar_lea.hbm %s0, %s122
          %s125 = sshll.u32 %s123, 4
          %s126 = int_to_ptr.hbm [resolvable:$true] %s125
          %s127 = sshll.u32 %s118, 4
          %s128 = int_to_ptr.vmem [resolvable:$true] %s127
          %130 = dma.hbm_to_vmem [thread:$0]  %s126, 256, %s128, %s115
        $region20: #{tpu_custom_call.1} parent=15 // pred_fallthru
          _
        // Predicated region
        $region21: #{tpu_custom_call.1} parent=15 // pred_check
          %p131 = pneg %p60
        $region22: #{tpu_custom_call.1} parent=15 // pred_check_branch
          %133 = sbr.rel (%p131) target = $region24
        $region23: #{tpu_custom_call.1} parent=15 // pred_region
          %p134 = scmp.lt.s32.totalorder %s14, 2
          %s135 = scalar_select %p134, %s14, 2
          %s136 = smul.addr %s135, 8
          %s137 = scalar_lea.vmem %s1, %s136
        $region24: #{tpu_custom_call.1} parent=15 // pred_fallthru
          _
      $region16: #{tpu_custom_call.1} parent=5 // pred_fallthru
        _
      %p138 = scmp.le.s32.totalorder 1, %s14
      %p139 = scmp.lt.s32.totalorder %s14, 4
      %p140 = pnand %p138, %p139
      %p141 = pneg %p140
      // Predicated region
      $region25: #{tpu_custom_call.1} parent=5 // pred_check
        _
      $region26: #{tpu_custom_call.1} parent=5 // pred_check_branch
        %143 = sbr.rel (%p140) target = $region28
      $region27: #{tpu_custom_call.1} parent=5 // pred_region
        %s144 = ssub.s32 %s14, 1
        %s145 = sand.u32 %s27, 1
        %s146 = scalar_lea.sflag [#allocation3], %s145
        %s147 = sand.u32 %s27, 1
        %s148 = smul.addr %s147, 16
        %s149 = scalar_lea.vmem [#allocation2], %s148
        // Predicated region
        $region29: #{tpu_custom_call.1} parent=27 // pred_check
          %p150 = pneg %p40
        $region30: #{tpu_custom_call.1} parent=27 // pred_check_branch
          %152 = sbr.rel (%p150) target = $region32
        $region31: #{tpu_custom_call.1} parent=27 // pred_region
          %154 = dma.done %s146, 256
        $region32: #{tpu_custom_call.1} parent=27 // pred_fallthru
          _
        %s155 = sand.u32 %s27, 1
        %s156 = scalar_lea.sflag [#allocation3], %s155
        %s157 = sand.u32 %s27, 1
        %s158 = smul.addr %s157, 16
        %s159 = scalar_lea.vmem [#allocation2], %s158
        %p160 = pneg %p40
        %p161 = pneg %p37
        %p162 = scmp.lt.s32.totalorder %s19, 2
        %s163 = scalar_select %p162, %s19, 2
        %s164 = smul.addr %s163, 8
        %s165 = scalar_lea.vmem %s1, %s164
        %p166 = pneg %p66
        %p167 = pneg %p63
        %p168 = pneg %p92
        %p169 = pneg %p89
        %s170 = sand.u32 %s79, 1
        %s171 = scalar_lea.sflag [#allocation4], %s170
        %s172 = sand.u32 %s79, 1
        %s173 = scalar_lea.vmem [#allocation5], %s172
        %p174 = scmp.lt.s32.totalorder %s19, 2
        %s175 = scalar_select %p174, %s19, 2
        %s176 = smul.addr %s175, 8
        %s177 = scalar_lea.vmem %s1, %s176
        %v178 = vld [vmem:[%s149] sm:$0xff]
        %v179 = vld [vmem:[%s149 + $0x8] sm:$0xff]
        %v180 = vld [vmem:[%s177] sm:$0xff]
        %v181 = vmax.f32 %v178, %v179
        %182 = vmax.xlane.f32.xlu0 %v181
        %v183 = vpop.xlane.xlu0 %182
        %v184 = vsub.f32 %v178, %v183
        %v185 = vsub.f32 %v179, %v183
        %v186 = vmul.f32 %v184, 1.442695
        %v187 = vpow.pop %v186
        %v188 = vmul.f32 %v185, 1.442695
        %v189 = vpow.pop %v188
        %v190 = vadd.f32 %v187, %v189
        %191 = vadd.xlane.f32.xlu0 %v190
        %v192 = vpop.xlane.xlu0 %191
        %v193 = vlog2.pop %v192
        %v194 = vmul.f32 %v193, 0.6931472
        %v195 = vadd.f32 %v184, %v185
        %196 = vadd.xlane.f32.xlu0 %v195
        %v197 = vpop.xlane.xlu0 %196
        %v198 = vlaneseq
        %v199 = vand.u32 %v198, 127
        %v200 = vadd.s32 %v199, 128
        %201 = vset.pattern.permute.xlu0 0
        %202 = vperm.xlu0 %201, %v180
        %v203 = vpop.permute.xlu0 %202
        %vm204 = vcmp.eq.s32.totalorder %v199, %v203
        %vm205 = vcmp.eq.s32.totalorder %v200, %v203
        %v206 = vsel %vm204, %v184, 0.0
        %v207 = vsel %vm205, %v185, 0.0
        %v208 = vadd.f32 %v206, %v207
        %209 = vadd.xlane.f32.xlu0 %v208
        %v210 = vpop.xlane.xlu0 %209
        %v211 = vmul.f32 %v197, 0.0003937008
        %v212 = vmul.f32 %v210, 0.8996063
        %v213 = vadd.f32 %v211, %v212
        %v214 = vmul.f32 %v184, 0.0003937008
        %v215 = vsub.f32 %v213, %v214
        %s216 = smul.u32 %s19, 8
        %v217 = vlaneseq
        %v218 = vshrl.u32 %v217, 7
        %v219 = vstv %s216
        %v220 = vadd.s32 %v219, %v218
        %vm221 = vcmp.lt.s32.totalorder %v220, 20
        %vm222 = vcmp.ne.s32.totalorder %v180, 0
        %vm223 = vmand %vm221, %vm222
        %v224 = vsub.f32 -0.8788164, %v215
        %v225 = vadd.f32 %v224, %v194
        %v226 = vsel %vm223, %v225, 0.0
        %vm227 = vcmask 7168
        %v228 = vsel %vm227, %v226, 0.0
        %229 = vadd.xlane.f32.xlu0 %v228
        %v230 = vpop.xlane.xlu0 %229
        %v231 = vrot.slane %v230, 4
        %v232 = vadd.f32 %v230, %v231
        %v233 = vrot.slane %v232, 2
        %v234 = vadd.f32 %v232, %v233
        %v235 = vrot.slane %v234, 1
        %v236 = vadd.f32 %v234, %v235
        %s237 = vtos %v236
        %v238 = vstv %s237
        %239 = vst [vmem:[%s173] sm:$0x1] %v238
        %s240 = sand.u32 %s79, 1
        %s241 = scalar_lea.sflag [#allocation4], %s240
        %s242 = sand.u32 %s79, 1
        %s243 = scalar_lea.vmem [#allocation5], %s242
        // Predicated region
        $region33: #{tpu_custom_call.1} parent=27 // pred_check
          %p244 = pneg %p89
        $region34: #{tpu_custom_call.1} parent=27 // pred_check_branch
          %246 = sbr.rel (%p244) target = $region36
        $region35: #{tpu_custom_call.1} parent=27 // pred_region
          %248 = vsyncadd %s241, 0
          %s249 = scalar_lea.hbm %s2, %s19
          %s251 = sshll.u32 %s243, 4
          %s252 = int_to_ptr.vmem [resolvable:$true] %s251
          %s253 = sshll.u32 %s249, 4
          %s254 = int_to_ptr.hbm [resolvable:$true] %s253
          %256 = dma.vmem_to_hbm [thread:$0]  %s252, 16, %s254, %s241
        $region36: #{tpu_custom_call.1} parent=27 // pred_fallthru
          _
      $region28: #{tpu_custom_call.1} parent=5 // pred_fallthru
        _
      %p257 = scmp.le.s32.totalorder 2, %s14
      // Predicated region
      $region37: #{tpu_custom_call.1} parent=5 // pred_check
        %p258 = pneg %p257
      $region38: #{tpu_custom_call.1} parent=5 // pred_check_branch
        %260 = sbr.rel (%p258) target = $region40
      $region39: #{tpu_custom_call.1} parent=5 // pred_region
        %s261 = ssub.s32 %s14, 2
        // Predicated region
        $region41: #{tpu_custom_call.1} parent=39 // pred_check
          %p262 = pneg %p95
        $region42: #{tpu_custom_call.1} parent=39 // pred_check_branch
          %264 = sbr.rel (%p262) target = $region44
        $region43: #{tpu_custom_call.1} parent=39 // pred_region
          %s265 = sand.u32 %s80, 1
          %s266 = scalar_lea.sflag [#allocation4], %s265
          %s267 = sand.u32 %s80, 1
          %s268 = scalar_lea.vmem [#allocation5], %s267
          %270 = dma.done %s266, 16
        $region44: #{tpu_custom_call.1} parent=39 // pred_fallthru
          _
      $region40: #{tpu_custom_call.1} parent=5 // pred_fallthru
        _
    $region6: #{tpu_custom_call.1} parent=1 // loop_footer
      %s18 = sadd.s32 1, %s14
    $region7: #{tpu_custom_call.1} parent=1 // loop_footer_branch
      %13 = sbr.rel target = $region3
    $region8: #{tpu_custom_call.1} parent=1 // loop_exit
      _
    %271 = vsyncpa [#allocation3], 1
    %s272 = scalar_lea.sflag [#allocation3], 1
    %273 = vsyncpa %s272, 1
    %274 = vsyncpa [#allocation4], 1
    %s275 = scalar_lea.sflag [#allocation4], 1
    %276 = vsyncpa %s275, 1

</llo_original>
